<compile_context>
chip_gen: v5e
topology: v5e:2x2
jax: 0.10.0
libtpu: 0.0.40
codegen_flags: <defaults>
</compile_context>

<pallas_src>
import functools

import jax
import jax.numpy as jnp
from jax.experimental import pallas as pl
from jax.experimental.pallas import tpu as pltpu

# ---- model hyperparameters (small, deterministic, in-script) ----------------
NTOKEN = 64     # output dim
NINP = 32       # input dim
NHID = 128      # hidden dim
NLAYERS = 2     # number of hidden (nhid -> nhid) blocks
BATCH = 16      # number of rows in the input batch
LANE = 128      # TPU lane width (output padded to a multiple of this)


def mlp_kernel(x_ref, w0_ref, b0_ref, wh_ref, bh_ref, wl_ref, bl_ref, o_ref,
               *, nlayers):
    """Fused MLP: (Linear+ReLU) -> nlayers*(Linear+ReLU) -> Linear.

    x_ref : [B, ninp]              bf16
    w0_ref: [ninp, nhid]     bf16  b0_ref: [1, nhid]           f32
    wh_ref: [nlayers, nhid, nhid] bf16  bh_ref: [nlayers, 1, nhid]  f32
    wl_ref: [nhid, ntok_pad] bf16  bl_ref: [1, ntok_pad]       f32
    o_ref : [B, ntok_pad]    f32  (lane-dense, padded to 128 columns)
    """
    # Input layer + ReLU: bf16 operands on the MXU, f32 accumulation.
    h = jnp.dot(x_ref[...], w0_ref[...],
                preferred_element_type=jnp.float32) + b0_ref[...]
    h = jnp.maximum(h, 0.0)

    # Hidden layers + ReLU (static Python loop, unrolled at trace time).
    for n in range(nlayers):
        h = jnp.dot(h.astype(jnp.bfloat16), wh_ref[n],
                    preferred_element_type=jnp.float32) + bh_ref[n]
        h = jnp.maximum(h, 0.0)

    # Output layer (no activation); padded -> lane-dense store.
    out = jnp.dot(h.astype(jnp.bfloat16), wl_ref[...],
                  preferred_element_type=jnp.float32) + bl_ref[...]
    o_ref[...] = out.astype(o_ref.dtype)


def mlp_forward(x, params):
    """Runs the fused Pallas MLP kernel (single step) and applies .squeeze()."""
    w0, b0, wh, bh, wl, bl = params
    B, _ = x.shape
    ntoken = wl.shape[1]
    nlayers = int(wh.shape[0])
    # nlayers == 0 would need a dummy wh/bh (0-sized leading dim); not supported.
    assert nlayers >= 1

    # bf16 MXU operands; biases (VPU adds) stay f32.
    x_bf = x.astype(jnp.bfloat16)
    w0_bf = w0.astype(jnp.bfloat16)
    wh_bf = wh.astype(jnp.bfloat16)

    # Pad the output dim to a multiple of 128 lanes for a lane-dense final store.
    npad = (-ntoken) % LANE
    wl_p = jnp.pad(wl, ((0, 0), (0, npad))).astype(jnp.bfloat16)
    bl_p = jnp.pad(bl, ((0, 0), (0, npad)))

    kernel = functools.partial(mlp_kernel, nlayers=nlayers)
    vmem_spec = pl.BlockSpec(memory_space=pltpu.MemorySpace.VMEM)

    out = pl.pallas_call(
        kernel,
        out_shape=jax.ShapeDtypeStruct((B, ntoken + npad), jnp.float32),
        in_specs=[vmem_spec] * 7,      # full arrays resident in VMEM, one step
        out_specs=vmem_spec,
    )(x_bf, w0_bf, b0, wh_bf, bh, wl_p, bl_p)

    # Drop the padding, then PyTorch's .squeeze() (no-op at these shapes).
    return jnp.squeeze(out[:, :ntoken]).astype(x.dtype)


def init_params(key, ntoken, ninp, nhid, nlayers, dtype=jnp.float32):
    """Deterministic parameter init matching nn.Linear shapes.

    PyTorch stores weight as [out, in]; we store the transposed [in, out]
    so the kernel computes x @ W + b.
    """
    keys = jax.random.split(key, 2 * (nlayers + 2))
    ki = iter(keys)

    def linear(fan_in, fan_out):
        bound = 1.0 / jnp.sqrt(fan_in)
        w = jax.random.uniform(next(ki), (fan_in, fan_out), dtype,
                               minval=-bound, maxval=bound)
        b = jax.random.uniform(next(ki), (1, fan_out), dtype,
                               minval=-bound, maxval=bound)
        return w, b

    w0, b0 = linear(ninp, nhid)
    whs, bhs = [], []
    for _ in range(nlayers):
        w, b = linear(nhid, nhid)
        whs.append(w)                               # [nhid, nhid]
        bhs.append(b)                               # [1, nhid]
    if nlayers > 0:
        wh = jnp.stack(whs, axis=0)                 # [nlayers, nhid, nhid]
        bh = jnp.stack(bhs, axis=0)                 # [nlayers, 1, nhid]
    else:
        wh = jnp.zeros((0, nhid, nhid), dtype)
        bh = jnp.zeros((0, 1, nhid), dtype)
    wl, bl = linear(nhid, ntoken)
    return w0, b0, wh, bh, wl, bl


def mlp_reference_f32(x, params):
    """Pure f32 plain-JAX reference."""
    w0, b0, wh, bh, wl, bl = params
    h = jnp.maximum(x @ w0 + b0, 0.0)
    for n in range(wh.shape[0]):
        h = jnp.maximum(h @ wh[n] + bh[n], 0.0)
    return jnp.squeeze(h @ wl + bl)


def mlp_reference_mixed(x, params):
    """Same mixed-precision recipe as the kernel (bf16 operands, f32 accum)."""
    w0, b0, wh, bh, wl, bl = params

    def dot(a, b):
        return jnp.dot(a.astype(jnp.bfloat16), b.astype(jnp.bfloat16),
                       preferred_element_type=jnp.float32)

    h = jnp.maximum(dot(x, w0) + b0, 0.0)
    for n in range(wh.shape[0]):
        h = jnp.maximum(dot(h, wh[n]) + bh[n], 0.0)
    return jnp.squeeze(dot(h, wl) + bl)


if __name__ == "__main__":
    key = jax.random.PRNGKey(0)
    kx, kp = jax.random.split(key)

    x = jax.random.normal(kx, (BATCH, NINP), dtype=jnp.float32)
    params = init_params(kp, NTOKEN, NINP, NHID, NLAYERS)

    out = jax.block_until_ready(mlp_forward(x, params))

    ref_mixed = mlp_reference_mixed(x, params)   # same bf16-operand recipe
    ref_f32 = mlp_reference_f32(x, params)       # full-precision sanity check
    assert out.shape == ref_f32.shape == (BATCH, NTOKEN)
    assert jnp.allclose(out, ref_mixed, atol=2e-2, rtol=2e-2)
    assert jnp.allclose(out, ref_f32, atol=1e-1, rtol=1e-1)

    print("KERNEL_OK")
</pallas_src>

<mosaic_0001>
module attributes {stable_mosaic.version = 11 : i64} {
  func.func @mlp_kernel(%arg0: memref<16x32xbf16, #tpu.memory_space<vmem>>, %arg1: memref<32x128xbf16, #tpu.memory_space<vmem>>, %arg2: memref<1x128xf32, #tpu.memory_space<vmem>>, %arg3: memref<2x128x128xbf16, #tpu.memory_space<vmem>>, %arg4: memref<2x1x128xf32, #tpu.memory_space<vmem>>, %arg5: memref<128x128xbf16, #tpu.memory_space<vmem>>, %arg6: memref<1x128xf32, #tpu.memory_space<vmem>>, %arg7: memref<16x128xf32, #tpu.memory_space<vmem>>) attributes {dimension_semantics = [], scalar_prefetch = 0 : i64, scratch_operands = 0 : i64, tpu.core_type = #tpu.core_type<tc>} {
    %c0 = arith.constant 0 : index
    %c0_0 = arith.constant 0 : index
    %0 = vector.load %arg0[%c0, %c0_0] : memref<16x32xbf16, #tpu.memory_space<vmem>>, vector<16x32xbf16>
    %c0_1 = arith.constant 0 : index
    %c0_2 = arith.constant 0 : index
    %1 = vector.load %arg1[%c0_1, %c0_2] : memref<32x128xbf16, #tpu.memory_space<vmem>>, vector<32x128xbf16>
    %cst = arith.constant dense<0.000000e+00> : vector<16x128xf32>
    %2 = tpu.matmul %0, %1, %cst {dimension_numbers = #tpu.dot_dimension_numbers<[1], [0], [0], [1], [0, 0, 1, 1], [], []>} : vector<16x32xbf16>, vector<32x128xbf16>, vector<16x128xf32> -> vector<16x128xf32>
    %c0_3 = arith.constant 0 : index
    %c0_4 = arith.constant 0 : index
    %3 = vector.load %arg2[%c0_3, %c0_4] : memref<1x128xf32, #tpu.memory_space<vmem>>, vector<1x128xf32>
    %4 = vector.broadcast %3 : vector<1x128xf32> to vector<16x128xf32>
    %5 = arith.addf %2, %4 : vector<16x128xf32>
    %cst_5 = arith.constant 0.000000e+00 : f32
    %6 = vector.broadcast %cst_5 : f32 to vector<16x128xf32>
    %7 = arith.maximumf %5, %6 : vector<16x128xf32>
    %8 = arith.truncf %7 : vector<16x128xf32> to vector<16x128xbf16>
    %c0_6 = arith.constant 0 : index
    %c0_7 = arith.constant 0 : index
    %c0_8 = arith.constant 0 : index
    %9 = vector.load %arg3[%c0_6, %c0_7, %c0_8] : memref<2x128x128xbf16, #tpu.memory_space<vmem>>, vector<1x128x128xbf16>
    %10 = vector.shape_cast %9 : vector<1x128x128xbf16> to vector<128x128xbf16>
    %cst_9 = arith.constant dense<0.000000e+00> : vector<16x128xf32>
    %11 = tpu.matmul %8, %10, %cst_9 {dimension_numbers = #tpu.dot_dimension_numbers<[1], [0], [0], [1], [0, 0, 1, 1], [], []>} : vector<16x128xbf16>, vector<128x128xbf16>, vector<16x128xf32> -> vector<16x128xf32>
    %c0_10 = arith.constant 0 : index
    %c0_11 = arith.constant 0 : index
    %c0_12 = arith.constant 0 : index
    %12 = vector.load %arg4[%c0_10, %c0_11, %c0_12] : memref<2x1x128xf32, #tpu.memory_space<vmem>>, vector<1x1x128xf32>
    %13 = vector.shape_cast %12 : vector<1x1x128xf32> to vector<1x128xf32>
    %14 = vector.broadcast %13 : vector<1x128xf32> to vector<16x128xf32>
    %15 = arith.addf %11, %14 : vector<16x128xf32>
    %cst_13 = arith.constant 0.000000e+00 : f32
    %16 = vector.broadcast %cst_13 : f32 to vector<16x128xf32>
    %17 = arith.maximumf %15, %16 : vector<16x128xf32>
    %18 = arith.truncf %17 : vector<16x128xf32> to vector<16x128xbf16>
    %c1 = arith.constant 1 : index
    %c0_14 = arith.constant 0 : index
    %c0_15 = arith.constant 0 : index
    %19 = vector.load %arg3[%c1, %c0_14, %c0_15] : memref<2x128x128xbf16, #tpu.memory_space<vmem>>, vector<1x128x128xbf16>
    %20 = vector.shape_cast %19 : vector<1x128x128xbf16> to vector<128x128xbf16>
    %cst_16 = arith.constant dense<0.000000e+00> : vector<16x128xf32>
    %21 = tpu.matmul %18, %20, %cst_16 {dimension_numbers = #tpu.dot_dimension_numbers<[1], [0], [0], [1], [0, 0, 1, 1], [], []>} : vector<16x128xbf16>, vector<128x128xbf16>, vector<16x128xf32> -> vector<16x128xf32>
    %c1_17 = arith.constant 1 : index
    %c0_18 = arith.constant 0 : index
    %c0_19 = arith.constant 0 : index
    %22 = vector.load %arg4[%c1_17, %c0_18, %c0_19] : memref<2x1x128xf32, #tpu.memory_space<vmem>>, vector<1x1x128xf32>
    %23 = vector.shape_cast %22 : vector<1x1x128xf32> to vector<1x128xf32>
    %24 = vector.broadcast %23 : vector<1x128xf32> to vector<16x128xf32>
    %25 = arith.addf %21, %24 : vector<16x128xf32>
    %cst_20 = arith.constant 0.000000e+00 : f32
    %26 = vector.broadcast %cst_20 : f32 to vector<16x128xf32>
    %27 = arith.maximumf %25, %26 : vector<16x128xf32>
    %28 = arith.truncf %27 : vector<16x128xf32> to vector<16x128xbf16>
    %c0_21 = arith.constant 0 : index
    %c0_22 = arith.constant 0 : index
    %29 = vector.load %arg5[%c0_21, %c0_22] : memref<128x128xbf16, #tpu.memory_space<vmem>>, vector<128x128xbf16>
    %cst_23 = arith.constant dense<0.000000e+00> : vector<16x128xf32>
    %30 = tpu.matmul %28, %29, %cst_23 {dimension_numbers = #tpu.dot_dimension_numbers<[1], [0], [0], [1], [0, 0, 1, 1], [], []>} : vector<16x128xbf16>, vector<128x128xbf16>, vector<16x128xf32> -> vector<16x128xf32>
    %c0_24 = arith.constant 0 : index
    %c0_25 = arith.constant 0 : index
    %31 = vector.load %arg6[%c0_24, %c0_25] : memref<1x128xf32, #tpu.memory_space<vmem>>, vector<1x128xf32>
    %32 = vector.broadcast %31 : vector<1x128xf32> to vector<16x128xf32>
    %33 = arith.addf %30, %32 : vector<16x128xf32>
    %c0_26 = arith.constant 0 : index
    %c0_27 = arith.constant 0 : index
    %34 = vector.load %arg7[%c0_26, %c0_27] : memref<16x128xf32, #tpu.memory_space<vmem>>, vector<16x128xf32>
    tpu.vector_store %arg7[%c0_26, %c0_27], %33 {strides = array<i32>} : memref<16x128xf32, #tpu.memory_space<vmem>>, vector<16x128xf32>,
    return
  }
}

</mosaic_0001>

<llo_original>
// kernel: tpu_custom_call.1
$region0: #{tpu_custom_call.1}
  #allocation0 [shape = 'u32[]', space=smem, size = 0x4, offset = 0x4, fixed_abs, tag = 'smem constant byte address 0x4 - core index']
  #allocation1 [shape = 'u32[72,128]{1,0:T(1,128)}', space=vmem, size = 0x9000, scoped, tag = 'internal scratch']
  %s0 = inlined_call_operand.hbm [shape: bf16[16,32], index: 0, kind: input, shape index: {}]
  %s1 = inlined_call_operand.hbm [shape: bf16[32,128], index: 1, kind: input, shape index: {}]
  %s2 = inlined_call_operand.vmem [shape: f32[1,128], index: 2, kind: input, shape index: {}]
  %s3 = inlined_call_operand.hbm [shape: bf16[2,128,128], index: 3, kind: input, shape index: {}]
  %s4 = inlined_call_operand.vmem [shape: f32[2,1,128], index: 4, kind: input, shape index: {}]
  %s5 = inlined_call_operand.hbm [shape: bf16[128,128], index: 5, kind: input, shape index: {}]
  %s6 = inlined_call_operand.vmem [shape: f32[1,128], index: 6, kind: input, shape index: {}]
  %s7 = inlined_call_operand.hbm [shape: f32[16,128], index: 7, kind: output, shape index: {}]
  %s8 = sld [smem:[#allocation0]]
  $region54: #{tpu_custom_call.1} parent=0
    _
  %s10 = ssub.s32 1, %s8
  %s11 = scalar_select 0, %s10, %s8
  $region1: #{tpu_custom_call.1} parent=0
    #allocation2 [shape = 'u8[4096]{0}', space=vmem, size = 0x1000, scoped, tag = 'input window, operand 0, single buffered']
    #allocation3 [shape = 's32[1]{0}', space=sflag, size = 0x4, scoped, tag = 'scoped memory for tpu_custom_call.1']
    #allocation4 [shape = 's32[1]{0}', space=sflag, size = 0x4, scoped, tag = 'scoped memory for tpu_custom_call.1']
    #allocation5 [shape = 'u8[8192]{0}', space=vmem, size = 0x2000, scoped, tag = 'input window, operand 1, single buffered']
    #allocation6 [shape = 's32[1]{0}', space=sflag, size = 0x4, scoped, tag = 'scoped memory for tpu_custom_call.1']
    #allocation7 [shape = 'u8[65536]{0}', space=vmem, size = 0x10000, scoped, tag = 'input window, operand 3, single buffered']
    #allocation8 [shape = 'u8[32768]{0}', space=vmem, size = 0x8000, scoped, tag = 'input window, operand 5, single buffered']
    #allocation9 [shape = 's32[1]{0}', space=sflag, size = 0x4, scoped, tag = 'scoped memory for tpu_custom_call.1']
    #allocation10 [shape = 'u8[8192]{0}', space=vmem, size = 0x2000, scoped, tag = 'output window, operand 0, single buffered']
    %12 = vsyncpa [#allocation3], 0
    %13 = vsyncpa [#allocation6], 0
    %14 = vsyncpa [#allocation9], 0
    %15 = vsyncpa [#allocation4], 0
    // Predicated region
    $region2: #{tpu_custom_call.1} parent=1 // pred_check
      _
    $region3: #{tpu_custom_call.1} parent=1 // pred_check_branch
      %17 = sbr.rel (0) target = $region5
    $region4: #{tpu_custom_call.1} parent=1 // pred_region
      %19 = vsyncadd [#allocation3], 0
      %s20 = sshll.u32 %s0, 4
      %s21 = int_to_ptr.hbm [resolvable:$true] %s20
      %s22 = sshll.u32 [#allocation2], 4
      %s23 = int_to_ptr.vmem [resolvable:$true] %s22
      %28 = dma.hbm_to_vmem [thread:$0]  %s21, 128, %s23, [#allocation3], 64, 64, 4
    $region5: #{tpu_custom_call.1} parent=1 // pred_fallthru
      _
    // Predicated region
    $region6: #{tpu_custom_call.1} parent=1 // pred_check
      _
    $region7: #{tpu_custom_call.1} parent=1 // pred_check_branch
      %30 = sbr.rel (0) target = $region9
    $region8: #{tpu_custom_call.1} parent=1 // pred_region
      %32 = vsyncadd [#allocation6], 0
      %s33 = sshll.u32 %s1, 4
      %s34 = int_to_ptr.hbm [resolvable:$true] %s33
      %s35 = sshll.u32 [#allocation5], 4
      %s36 = int_to_ptr.vmem [resolvable:$true] %s35
      %41 = dma.hbm_to_vmem [thread:$0]  %s34, 256, %s36, [#allocation6], 64, 64, 4
    $region9: #{tpu_custom_call.1} parent=1 // pred_fallthru
      _
    // Predicated region
    $region10: #{tpu_custom_call.1} parent=1 // pred_check
      _
    $region11: #{tpu_custom_call.1} parent=1 // pred_check_branch
      %43 = sbr.rel (0) target = $region13
    $region12: #{tpu_custom_call.1} parent=1 // pred_region
      _
    $region13: #{tpu_custom_call.1} parent=1 // pred_fallthru
      _
    // Predicated region
    $region14: #{tpu_custom_call.1} parent=1 // pred_check
      _
    $region15: #{tpu_custom_call.1} parent=1 // pred_check_branch
      %45 = sbr.rel (0) target = $region17
    $region16: #{tpu_custom_call.1} parent=1 // pred_region
      %47 = vsyncadd [#allocation6], 0
      %s48 = sshll.u32 %s3, 4
      %s49 = int_to_ptr.hbm [resolvable:$true] %s48
      %s50 = sshll.u32 [#allocation7], 4
      %s51 = int_to_ptr.vmem [resolvable:$true] %s50
      %56 = dma.hbm_to_vmem [thread:$0]  %s49, 2048, %s51, [#allocation6], 64, 64, 4
    $region17: #{tpu_custom_call.1} parent=1 // pred_fallthru
      _
    // Predicated region
    $region18: #{tpu_custom_call.1} parent=1 // pred_check
      _
    $region19: #{tpu_custom_call.1} parent=1 // pred_check_branch
      %58 = sbr.rel (0) target = $region21
    $region20: #{tpu_custom_call.1} parent=1 // pred_region
      _
    $region21: #{tpu_custom_call.1} parent=1 // pred_fallthru
      _
    // Predicated region
    $region22: #{tpu_custom_call.1} parent=1 // pred_check
      _
    $region23: #{tpu_custom_call.1} parent=1 // pred_check_branch
      %60 = sbr.rel (0) target = $region25
    $region24: #{tpu_custom_call.1} parent=1 // pred_region
      %62 = vsyncadd [#allocation9], 0
      %s63 = sshll.u32 %s5, 4
      %s64 = int_to_ptr.hbm [resolvable:$true] %s63
      %s65 = sshll.u32 [#allocation8], 4
      %s66 = int_to_ptr.vmem [resolvable:$true] %s65
      %71 = dma.hbm_to_vmem [thread:$0]  %s64, 1024, %s66, [#allocation9], 64, 64, 4
    $region25: #{tpu_custom_call.1} parent=1 // pred_fallthru
      _
    // Predicated region
    $region26: #{tpu_custom_call.1} parent=1 // pred_check
      _
    $region27: #{tpu_custom_call.1} parent=1 // pred_check_branch
      %73 = sbr.rel (0) target = $region29
    $region28: #{tpu_custom_call.1} parent=1 // pred_region
      _
    $region29: #{tpu_custom_call.1} parent=1 // pred_fallthru
      _
    // Predicated region
    $region30: #{tpu_custom_call.1} parent=1 // pred_check
      _
    $region31: #{tpu_custom_call.1} parent=1 // pred_check_branch
      %75 = sbr.rel (0) target = $region33
    $region32: #{tpu_custom_call.1} parent=1 // pred_region
      %77 = dma.done [#allocation3], 128
    $region33: #{tpu_custom_call.1} parent=1 // pred_fallthru
      _
    // Predicated region
    $region34: #{tpu_custom_call.1} parent=1 // pred_check
      _
    $region35: #{tpu_custom_call.1} parent=1 // pred_check_branch
      %79 = sbr.rel (0) target = $region37
    $region36: #{tpu_custom_call.1} parent=1 // pred_region
      %81 = dma.done [#allocation6], 256
    $region37: #{tpu_custom_call.1} parent=1 // pred_fallthru
      _
    // Predicated region
    $region38: #{tpu_custom_call.1} parent=1 // pred_check
      _
    $region39: #{tpu_custom_call.1} parent=1 // pred_check_branch
      %83 = sbr.rel (0) target = $region41
    $region40: #{tpu_custom_call.1} parent=1 // pred_region
      %85 = dma.done [#allocation6], 2048
    $region41: #{tpu_custom_call.1} parent=1 // pred_fallthru
      _
    // Predicated region
    $region42: #{tpu_custom_call.1} parent=1 // pred_check
      _
    $region43: #{tpu_custom_call.1} parent=1 // pred_check_branch
      %87 = sbr.rel (0) target = $region45
    $region44: #{tpu_custom_call.1} parent=1 // pred_region
      %89 = dma.done [#allocation9], 1024
    $region45: #{tpu_custom_call.1} parent=1 // pred_fallthru
      _
    %v91 = vld [vmem:[#allocation2] sm:$0xf]
    %v92 = vld [vmem:[#allocation2 + $0x4] sm:$0xf]
    %v93 = vld [vmem:[#allocation5] sm:$0xf]
    %v94 = vld [vmem:[#allocation5 + $0x4] sm:$0xf]
    %v95 = vld [vmem:[#allocation5 + $0x8] sm:$0xf]
    %v96 = vld [vmem:[#allocation5 + $0xc] sm:$0xf]
    %v97 = vld [vmem:[%s2] sm:$0x1]
    %v99 = vperm.slane %v97, 0
    %v103 = vunpack.c.l.b16 %v91
    %v104 = vunpack.c.l.b16 %v92
    %v105 = vpack.c.b16 %v104, %v103
    %v110 = vunpack.c.l.b16 %v93
    %v111 = vunpack.c.l.b16 %v94
    %v112 = vunpack.c.l.b16 %v95
    %v113 = vunpack.c.l.b16 %v96
    %v114 = vpack.c.b16 %v111, %v110
    %v115 = vpack.c.b16 %v113, %v112
    %vm118 = vcmask 261120
    %v120 = vsel %vm118, %v105, 0
    %122 = vmatpush.bf16.msra.mxu0 0
    %123 = vmatpush.bf16.msra.mxu0 0
    %124 = vmatpush.bf16.msra.mxu0 0
    %125 = vmatpush.bf16.msra.mxu0 0
    %126 = vmatpush.bf16.msra.mxu0 0
    %127 = vmatpush.bf16.msra.mxu0 0
    %128 = vmatpush.bf16.msra.mxu0 %v115
    %129 = vmatpush.bf16.msra.mxu0 %v114
    %130 = vmatmul.bf16.gmra.mxu0 %v120
    %v131 = vpop.f32.mrf.mxu0
    %v132 = vadd.f32 %v99, %v131
    %v133 = vpop.f32.mrf.mxu0
    %v134 = vadd.f32 %v99, %v133
    %135 = vdwg.mxu0
    %v136 = vmax.f32 %v132, 0.0
    %v137 = vmax.f32 %v134, 0.0
    %v138 = vpack.c.bf16 %v137, %v136
    %v139 = vld [vmem:[#allocation7] sm:$0xf]
    %v140 = vld [vmem:[#allocation7 + $0x4] sm:$0xf]
    %v141 = vld [vmem:[#allocation7 + $0x8] sm:$0xf]
    %v142 = vld [vmem:[#allocation7 + $0xc] sm:$0xf]
    %v143 = vld [vmem:[#allocation7 + $0x10] sm:$0xf]
    %v144 = vld [vmem:[#allocation7 + $0x14] sm:$0xf]
    %v145 = vld [vmem:[#allocation7 + $0x18] sm:$0xf]
    %v146 = vld [vmem:[#allocation7 + $0x1c] sm:$0xf]
    %v147 = vld [vmem:[#allocation7 + $0x20] sm:$0xf]
    %v148 = vld [vmem:[#allocation7 + $0x24] sm:$0xf]
    %v149 = vld [vmem:[#allocation7 + $0x28] sm:$0xf]
    %v150 = vld [vmem:[#allocation7 + $0x2c] sm:$0xf]
    %v151 = vld [vmem:[#allocation7 + $0x30] sm:$0xf]
    %v152 = vld [vmem:[#allocation7 + $0x34] sm:$0xf]
    %v153 = vld [vmem:[#allocation7 + $0x38] sm:$0xf]
    %v154 = vld [vmem:[#allocation7 + $0x3c] sm:$0xf]
    %v155 = vld [vmem:[%s4] sm:$0x1]
    %v157 = vperm.slane %v155, 0
    %v175 = vunpack.c.l.b16 %v139
    %v176 = vunpack.c.l.b16 %v140
    %v177 = vunpack.c.l.b16 %v141
    %v178 = vunpack.c.l.b16 %v142
    %v179 = vunpack.c.l.b16 %v143
    %v180 = vunpack.c.l.b16 %v144
    %v181 = vunpack.c.l.b16 %v145
    %v182 = vunpack.c.l.b16 %v146
    %v183 = vunpack.c.l.b16 %v147
    %v184 = vunpack.c.l.b16 %v148
    %v185 = vunpack.c.l.b16 %v149
    %v186 = vunpack.c.l.b16 %v150
    %v187 = vunpack.c.l.b16 %v151
    %v188 = vunpack.c.l.b16 %v152
    %v189 = vunpack.c.l.b16 %v153
    %v190 = vunpack.c.l.b16 %v154
    %v191 = vpack.c.b16 %v176, %v175
    %v192 = vpack.c.b16 %v178, %v177
    %v193 = vpack.c.b16 %v180, %v179
    %v194 = vpack.c.b16 %v182, %v181
    %v195 = vpack.c.b16 %v184, %v183
    %v196 = vpack.c.b16 %v186, %v185
    %v197 = vpack.c.b16 %v188, %v187
    %v198 = vpack.c.b16 %v190, %v189
    %207 = vmatpush.bf16.msra.mxu0 %v198
    %208 = vmatpush.bf16.msra.mxu0 %v197
    %209 = vmatpush.bf16.msra.mxu0 %v196
    %210 = vmatpush.bf16.msra.mxu0 %v195
    %211 = vmatpush.bf16.msra.mxu0 %v194
    %212 = vmatpush.bf16.msra.mxu0 %v193
    %213 = vmatpush.bf16.msra.mxu0 %v192
    %214 = vmatpush.bf16.msra.mxu0 %v191
    %215 = vmatmul.bf16.gmra.mxu0 %v138
    %v216 = vpop.f32.mrf.mxu0
    %v217 = vadd.f32 %v157, %v216
    %v218 = vpop.f32.mrf.mxu0
    %v219 = vadd.f32 %v157, %v218
    %220 = vdwg.mxu0
    %v221 = vmax.f32 %v217, 0.0
    %v222 = vmax.f32 %v219, 0.0
    %v223 = vpack.c.bf16 %v222, %v221
    %s224 = scalar_lea.vmem [#allocation7], 64
    %v225 = vld [vmem:[%s224] sm:$0xf]
    %v226 = vld [vmem:[%s224 + $0x4] sm:$0xf]
    %v227 = vld [vmem:[%s224 + $0x8] sm:$0xf]
    %v228 = vld [vmem:[%s224 + $0xc] sm:$0xf]
    %v229 = vld [vmem:[%s224 + $0x10] sm:$0xf]
    %v230 = vld [vmem:[%s224 + $0x14] sm:$0xf]
    %v231 = vld [vmem:[%s224 + $0x18] sm:$0xf]
    %v232 = vld [vmem:[%s224 + $0x1c] sm:$0xf]
    %v233 = vld [vmem:[%s224 + $0x20] sm:$0xf]
    %v234 = vld [vmem:[%s224 + $0x24] sm:$0xf]
    %v235 = vld [vmem:[%s224 + $0x28] sm:$0xf]
    %v236 = vld [vmem:[%s224 + $0x2c] sm:$0xf]
    %v237 = vld [vmem:[%s224 + $0x30] sm:$0xf]
    %v238 = vld [vmem:[%s224 + $0x34] sm:$0xf]
    %v239 = vld [vmem:[%s224 + $0x38] sm:$0xf]
    %v240 = vld [vmem:[%s224 + $0x3c] sm:$0xf]
    %s241 = scalar_lea.vmem %s4, 1
    %v242 = vld [vmem:[%s241] sm:$0x1]
    %v244 = vperm.slane %v242, 0
    %v262 = vunpack.c.l.b16 %v225
    %v263 = vunpack.c.l.b16 %v226
    %v264 = vunpack.c.l.b16 %v227
    %v265 = vunpack.c.l.b16 %v228
    %v266 = vunpack.c.l.b16 %v229
    %v267 = vunpack.c.l.b16 %v230
    %v268 = vunpack.c.l.b16 %v231
    %v269 = vunpack.c.l.b16 %v232
    %v270 = vunpack.c.l.b16 %v233
    %v271 = vunpack.c.l.b16 %v234
    %v272 = vunpack.c.l.b16 %v235
    %v273 = vunpack.c.l.b16 %v236
    %v274 = vunpack.c.l.b16 %v237
    %v275 = vunpack.c.l.b16 %v238
    %v276 = vunpack.c.l.b16 %v239
    %v277 = vunpack.c.l.b16 %v240
    %v278 = vpack.c.b16 %v263, %v262
    %v279 = vpack.c.b16 %v265, %v264
    %v280 = vpack.c.b16 %v267, %v266
    %v281 = vpack.c.b16 %v269, %v268
    %v282 = vpack.c.b16 %v271, %v270
    %v283 = vpack.c.b16 %v273, %v272
    %v284 = vpack.c.b16 %v275, %v274
    %v285 = vpack.c.b16 %v277, %v276
    %294 = vmatpush.bf16.msra.mxu0 %v285
    %295 = vmatpush.bf16.msra.mxu0 %v284
    %296 = vmatpush.bf16.msra.mxu0 %v283
    %297 = vmatpush.bf16.msra.mxu0 %v282
    %298 = vmatpush.bf16.msra.mxu0 %v281
    %299 = vmatpush.bf16.msra.mxu0 %v280
    %300 = vmatpush.bf16.msra.mxu0 %v279
    %301 = vmatpush.bf16.msra.mxu0 %v278
    %302 = vmatmul.bf16.gmra.mxu0 %v223
    %v303 = vpop.f32.mrf.mxu0
    %v304 = vadd.f32 %v244, %v303
    %v305 = vpop.f32.mrf.mxu0
    %v306 = vadd.f32 %v244, %v305
    %307 = vdwg.mxu0
    %v308 = vmax.f32 %v304, 0.0
    %v309 = vmax.f32 %v306, 0.0
    %v310 = vpack.c.bf16 %v309, %v308
    %v311 = vld [vmem:[#allocation8] sm:$0xf]
    %v312 = vld [vmem:[#allocation8 + $0x4] sm:$0xf]
    %v313 = vld [vmem:[#allocation8 + $0x8] sm:$0xf]
    %v314 = vld [vmem:[#allocation8 + $0xc] sm:$0xf]
    %v315 = vld [vmem:[#allocation8 + $0x10] sm:$0xf]
    %v316 = vld [vmem:[#allocation8 + $0x14] sm:$0xf]
    %v317 = vld [vmem:[#allocation8 + $0x18] sm:$0xf]
    %v318 = vld [vmem:[#allocation8 + $0x1c] sm:$0xf]
    %v319 = vld [vmem:[#allocation8 + $0x20] sm:$0xf]
    %v320 = vld [vmem:[#allocation8 + $0x24] sm:$0xf]
    %v321 = vld [vmem:[#allocation8 + $0x28] sm:$0xf]
    %v322 = vld [vmem:[#allocation8 + $0x2c] sm:$0xf]
    %v323 = vld [vmem:[#allocation8 + $0x30] sm:$0xf]
    %v324 = vld [vmem:[#allocation8 + $0x34] sm:$0xf]
    %v325 = vld [vmem:[#allocation8 + $0x38] sm:$0xf]
    %v326 = vld [vmem:[#allocation8 + $0x3c] sm:$0xf]
    %v327 = vld [vmem:[%s6] sm:$0x1]
    %v329 = vperm.slane %v327, 0
    %v347 = vunpack.c.l.b16 %v311
    %v348 = vunpack.c.l.b16 %v312
    %v349 = vunpack.c.l.b16 %v313
    %v350 = vunpack.c.l.b16 %v314
    %v351 = vunpack.c.l.b16 %v315
    %v352 = vunpack.c.l.b16 %v316
    %v353 = vunpack.c.l.b16 %v317
    %v354 = vunpack.c.l.b16 %v318
    %v355 = vunpack.c.l.b16 %v319
    %v356 = vunpack.c.l.b16 %v320
    %v357 = vunpack.c.l.b16 %v321
    %v358 = vunpack.c.l.b16 %v322
    %v359 = vunpack.c.l.b16 %v323
    %v360 = vunpack.c.l.b16 %v324
    %v361 = vunpack.c.l.b16 %v325
    %v362 = vunpack.c.l.b16 %v326
    %v363 = vpack.c.b16 %v348, %v347
    %v364 = vpack.c.b16 %v350, %v349
    %v365 = vpack.c.b16 %v352, %v351
    %v366 = vpack.c.b16 %v354, %v353
    %v367 = vpack.c.b16 %v356, %v355
    %v368 = vpack.c.b16 %v358, %v357
    %v369 = vpack.c.b16 %v360, %v359
    %v370 = vpack.c.b16 %v362, %v361
    %379 = vmatpush.bf16.msra.mxu0 %v370
    %380 = vmatpush.bf16.msra.mxu0 %v369
    %381 = vmatpush.bf16.msra.mxu0 %v368
    %382 = vmatpush.bf16.msra.mxu0 %v367
    %383 = vmatpush.bf16.msra.mxu0 %v366
    %384 = vmatpush.bf16.msra.mxu0 %v365
    %385 = vmatpush.bf16.msra.mxu0 %v364
    %386 = vmatpush.bf16.msra.mxu0 %v363
    %387 = vmatmul.bf16.gmra.mxu0 %v310
    %v388 = vpop.f32.mrf.mxu0
    %v389 = vadd.f32 %v329, %v388
    %v390 = vpop.f32.mrf.mxu0
    %v391 = vadd.f32 %v329, %v390
    %392 = vdwg.mxu0
    %393 = vst [vmem:[#allocation10] sm:$0xff] %v389
    %394 = vst [vmem:[#allocation10 + $0x8] sm:$0xff] %v391
    // Predicated region
    $region46: #{tpu_custom_call.1} parent=1 // pred_check
      _
    $region47: #{tpu_custom_call.1} parent=1 // pred_check_branch
      %396 = sbr.rel (0) target = $region49
    $region48: #{tpu_custom_call.1} parent=1 // pred_region
      %398 = vsyncadd [#allocation4], 0
      %s399 = sshll.u32 [#allocation10], 4
      %s400 = int_to_ptr.vmem [resolvable:$true] %s399
      %s401 = sshll.u32 %s7, 4
      %s402 = int_to_ptr.hbm [resolvable:$true] %s401
      %407 = dma.vmem_to_hbm [thread:$0]  %s400, 256, %s402, [#allocation4], 128, 128, 8
    $region49: #{tpu_custom_call.1} parent=1 // pred_fallthru
      _
    // Predicated region
    $region50: #{tpu_custom_call.1} parent=1 // pred_check
      _
    $region51: #{tpu_custom_call.1} parent=1 // pred_check_branch
      %409 = sbr.rel (0) target = $region53
    $region52: #{tpu_custom_call.1} parent=1 // pred_region
      %411 = dma.done [#allocation4], 256
    $region53: #{tpu_custom_call.1} parent=1 // pred_fallthru
      _
    %412 = vsyncpa [#allocation3], 1
    %413 = vsyncpa [#allocation6], 1
    %414 = vsyncpa [#allocation9], 1
    %415 = vsyncpa [#allocation4], 1

</llo_original>
